<compile_context>
chip_gen: v5e
topology: v5e:2x2
jax: 0.10.0
libtpu: 0.0.40
codegen_flags: <defaults>
</compile_context>

<pallas_src>
import jax
import jax.numpy as jnp
from jax.experimental import pallas as pl
from jax.experimental.pallas import tpu as pltpu


def regional_enc_kernel(x_ref, w_ref, b_ref, o_ref):
    # x_ref: (TM, Keff), w_ref: (Keff, Dout), b_ref: (1, Dout), o_ref: (TM, Dout)
    x = x_ref[...].astype(jnp.float32)
    w = w_ref[...].astype(jnp.float32)
    y = b_ref[...].astype(jnp.float32)           # (1, Dout) broadcast over rows
    keff = x_ref.shape[1]                        # static (4, or ratio*4 when packed)
    # Shallow contraction unrolled on the VPU (keeps the MXU out of the path).
    for k in range(keff):
        y = y + x[:, k:k + 1] * w[k:k + 1, :]
    o_ref[...] = jnp.maximum(y, 0.0).astype(o_ref.dtype)


def regional_encodings(x, weight, bias, *, tm=None,
                       vmem_limit_bytes=64 * 1024 * 1024):
    """relu(x @ weight + bias) with x: (B, R, 4), weight: (4, D), bias: (D,).

    `tm` is the row tile in the (possibly lane-packed) 2-D view.
    """
    B, R, K = x.shape
    assert K == 4, "bounding boxes have 4 coordinates"
    D = weight.shape[1]
    n = B * R

    itemsize = jnp.dtype(x.dtype).itemsize
    # sublane packing: 8 rows for f32, 16 for bf16, 32 for 8-bit types
    align = max(8, 32 // itemsize)

    # ---- lane-dense output packing (fold `ratio` rows into 128 lanes) ------
    ratio = 128 // D if (D < 128 and 128 % D == 0) else 1
    if ratio > 1 and n % ratio != 0:
        ratio = 1                                 # fallback: unpacked path

    keff = ratio * K
    lane_w = ratio * D
    n_rows = n // ratio

    x2 = x.reshape(n_rows, keff)                  # row-major reshape: metadata only
    if ratio > 1:
        # block-diagonal expanded weight: row j*4+k holds weight[k] at cols j*D:(j+1)*D
        w2 = jnp.kron(jnp.eye(ratio, dtype=weight.dtype), weight)   # (keff, lane_w)
        b2 = jnp.tile(bias, ratio).reshape(1, lane_w)
    else:
        w2 = weight                               # (4, D)
        b2 = bias.reshape(1, D)

    if tm is None:
        # Biggest row tile whose double-buffered in/out tiles (+ f32 temp)
        # fit comfortably inside the scoped-VMEM budget on every generation.
        budget = 24 * 1024 * 1024
        per_row = 2 * (lane_w * itemsize + keff * itemsize) + 4 * lane_w
        tm = budget // max(per_row, 1)
        tm = max(align, min(2048, tm))
        tm = (tm // align) * align

    if n_rows <= tm:
        tm = n_rows                               # one block == full row axis (always legal)
    grid = (pl.cdiv(n_rows, tm),)                 # ragged last block handled by Pallas

    out = pl.pallas_call(
        regional_enc_kernel,
        out_shape=jax.ShapeDtypeStruct((n_rows, lane_w), x.dtype),
        grid_spec=pltpu.PrefetchScalarGridSpec(
            num_scalar_prefetch=0,
            grid=grid,
            in_specs=[
                pl.BlockSpec((tm, keff), lambda i: (i, 0)),      # x row tile
                pl.BlockSpec((keff, lane_w), lambda i: (0, 0)),  # weight (VMEM-resident)
                pl.BlockSpec((1, lane_w), lambda i: (0, 0)),     # bias (VMEM-resident)
            ],
            out_specs=pl.BlockSpec((tm, lane_w), lambda i: (i, 0)),
        ),
        compiler_params=pltpu.CompilerParams(
            dimension_semantics=("parallel",),
            vmem_limit_bytes=vmem_limit_bytes,
        ),
    )(x2, w2, b2)

    # Underlying row-major buffer is identical to an (n, D) layout; metadata reshape.
    return out.reshape(B, R, D)


def regional_encodings_ref(x, weight, bias):
    return jnp.maximum(jnp.einsum("brk,kd->brd", x, weight) + bias, 0.0)


if __name__ == "__main__":
    key = jax.random.PRNGKey(0)
    kx, kw, kb, kx2, kw2, kb2, kx3, kw3, kb3 = jax.random.split(key, 9)

    # ---- primary test: d_model=32, batch=2, num_regions=8 (packed path) ----
    d_model = 32
    batch, num_regions = 2, 8
    # Linear(4, d_model): stored transposed as (4, d_model) for the row matmul
    weight = jax.random.normal(kw, (4, d_model), dtype=jnp.float32) * 0.1
    bias = jax.random.normal(kb, (d_model,), dtype=jnp.float32) * 0.1
    x = jax.random.uniform(kx, (batch, num_regions, 4), dtype=jnp.float32)

    out = jax.block_until_ready(regional_encodings(x, weight, bias))
    ref = regional_encodings_ref(x, weight, bias)
    assert out.shape == (batch, num_regions, d_model)
    assert jnp.allclose(out, ref, atol=1e-5, rtol=1e-5)

    # ---- secondary test: multi-step grid with a ragged last block ----------
    d_model2 = 64
    batch2, num_regions2 = 4, 100                 # n = 400 -> 200 packed rows, tm=64 -> ragged
    weight2 = jax.random.normal(kw2, (4, d_model2), dtype=jnp.float32) * 0.1
    bias2 = jax.random.normal(kb2, (d_model2,), dtype=jnp.float32) * 0.1
    x2 = jax.random.uniform(kx2, (batch2, num_regions2, 4), dtype=jnp.float32)

    out2 = jax.block_until_ready(regional_encodings(x2, weight2, bias2, tm=64))
    ref2 = regional_encodings_ref(x2, weight2, bias2)
    assert out2.shape == (batch2, num_regions2, d_model2)
    assert jnp.allclose(out2, ref2, atol=1e-5, rtol=1e-5)

    # ---- tertiary test: unpacked fallback (row count not divisible) --------
    d_model3 = 32
    batch3, num_regions3 = 1, 5                   # n = 5, ratio=4 does not divide -> fallback
    weight3 = jax.random.normal(kw3, (4, d_model3), dtype=jnp.float32) * 0.1
    bias3 = jax.random.normal(kb3, (d_model3,), dtype=jnp.float32) * 0.1
    x3 = jax.random.uniform(kx3, (batch3, num_regions3, 4), dtype=jnp.float32)

    out3 = jax.block_until_ready(regional_encodings(x3, weight3, bias3))
    ref3 = regional_encodings_ref(x3, weight3, bias3)
    assert out3.shape == (batch3, num_regions3, d_model3)
    assert jnp.allclose(out3, ref3, atol=1e-5, rtol=1e-5)

    print("KERNEL_OK")
</pallas_src>

<mosaic_0001>
module attributes {stable_mosaic.version = 11 : i64} {
  func.func @regional_enc_kernel(%arg0: i32, %arg1: memref<4x16xf32, #tpu.memory_space<vmem>>, %arg2: memref<16x128xf32, #tpu.memory_space<vmem>>, %arg3: memref<1x128xf32, #tpu.memory_space<vmem>>, %arg4: memref<4x128xf32, #tpu.memory_space<vmem>>) attributes {dimension_semantics = [#tpu.dimension_semantics<parallel>], iteration_bounds = array<i64: 1>, scalar_prefetch = 0 : i64, scratch_operands = 0 : i64, tpu.core_type = #tpu.core_type<tc>, window_params = [{transform_indices = @transform_0, window_bounds = array<i64: 4, 16>}, {pipeline_mode = #tpu.pipeline_mode<synchronous>, transform_indices = @transform_1, window_bounds = array<i64: 16, 128>}, {pipeline_mode = #tpu.pipeline_mode<synchronous>, transform_indices = @transform_2, window_bounds = array<i64: 1, 128>}, {transform_indices = @transform_3, window_bounds = array<i64: 4, 128>}]} {
    %c0 = arith.constant 0 : index
    %c0_0 = arith.constant 0 : index
    %0 = vector.load %arg1[%c0, %c0_0] : memref<4x16xf32, #tpu.memory_space<vmem>>, vector<4x16xf32>
    %c0_1 = arith.constant 0 : index
    %c0_2 = arith.constant 0 : index
    %1 = vector.load %arg2[%c0_1, %c0_2] : memref<16x128xf32, #tpu.memory_space<vmem>>, vector<16x128xf32>
    %c0_3 = arith.constant 0 : index
    %c0_4 = arith.constant 0 : index
    %2 = vector.load %arg3[%c0_3, %c0_4] : memref<1x128xf32, #tpu.memory_space<vmem>>, vector<1x128xf32>
    %3 = vector.extract_strided_slice %0 {offsets = [0, 0], sizes = [4, 1], strides = [1, 1]} : vector<4x16xf32> to vector<4x1xf32>
    %4 = vector.extract_strided_slice %1 {offsets = [0, 0], sizes = [1, 128], strides = [1, 1]} : vector<16x128xf32> to vector<1x128xf32>
    %5 = vector.broadcast %3 : vector<4x1xf32> to vector<4x128xf32>
    %6 = vector.broadcast %4 : vector<1x128xf32> to vector<4x128xf32>
    %7 = arith.mulf %5, %6 : vector<4x128xf32>
    %8 = vector.broadcast %2 : vector<1x128xf32> to vector<4x128xf32>
    %9 = arith.addf %8, %7 : vector<4x128xf32>
    %10 = vector.extract_strided_slice %0 {offsets = [0, 1], sizes = [4, 1], strides = [1, 1]} : vector<4x16xf32> to vector<4x1xf32>
    %11 = vector.extract_strided_slice %1 {offsets = [1, 0], sizes = [1, 128], strides = [1, 1]} : vector<16x128xf32> to vector<1x128xf32>
    %12 = vector.broadcast %10 : vector<4x1xf32> to vector<4x128xf32>
    %13 = vector.broadcast %11 : vector<1x128xf32> to vector<4x128xf32>
    %14 = arith.mulf %12, %13 : vector<4x128xf32>
    %15 = arith.addf %9, %14 : vector<4x128xf32>
    %16 = vector.extract_strided_slice %0 {offsets = [0, 2], sizes = [4, 1], strides = [1, 1]} : vector<4x16xf32> to vector<4x1xf32>
    %17 = vector.extract_strided_slice %1 {offsets = [2, 0], sizes = [1, 128], strides = [1, 1]} : vector<16x128xf32> to vector<1x128xf32>
    %18 = vector.broadcast %16 : vector<4x1xf32> to vector<4x128xf32>
    %19 = vector.broadcast %17 : vector<1x128xf32> to vector<4x128xf32>
    %20 = arith.mulf %18, %19 : vector<4x128xf32>
    %21 = arith.addf %15, %20 : vector<4x128xf32>
    %22 = vector.extract_strided_slice %0 {offsets = [0, 3], sizes = [4, 1], strides = [1, 1]} : vector<4x16xf32> to vector<4x1xf32>
    %23 = vector.extract_strided_slice %1 {offsets = [3, 0], sizes = [1, 128], strides = [1, 1]} : vector<16x128xf32> to vector<1x128xf32>
    %24 = vector.broadcast %22 : vector<4x1xf32> to vector<4x128xf32>
    %25 = vector.broadcast %23 : vector<1x128xf32> to vector<4x128xf32>
    %26 = arith.mulf %24, %25 : vector<4x128xf32>
    %27 = arith.addf %21, %26 : vector<4x128xf32>
    %28 = vector.extract_strided_slice %0 {offsets = [0, 4], sizes = [4, 1], strides = [1, 1]} : vector<4x16xf32> to vector<4x1xf32>
    %29 = vector.extract_strided_slice %1 {offsets = [4, 0], sizes = [1, 128], strides = [1, 1]} : vector<16x128xf32> to vector<1x128xf32>
    %30 = vector.broadcast %28 : vector<4x1xf32> to vector<4x128xf32>
    %31 = vector.broadcast %29 : vector<1x128xf32> to vector<4x128xf32>
    %32 = arith.mulf %30, %31 : vector<4x128xf32>
    %33 = arith.addf %27, %32 : vector<4x128xf32>
    %34 = vector.extract_strided_slice %0 {offsets = [0, 5], sizes = [4, 1], strides = [1, 1]} : vector<4x16xf32> to vector<4x1xf32>
    %35 = vector.extract_strided_slice %1 {offsets = [5, 0], sizes = [1, 128], strides = [1, 1]} : vector<16x128xf32> to vector<1x128xf32>
    %36 = vector.broadcast %34 : vector<4x1xf32> to vector<4x128xf32>
    %37 = vector.broadcast %35 : vector<1x128xf32> to vector<4x128xf32>
    %38 = arith.mulf %36, %37 : vector<4x128xf32>
    %39 = arith.addf %33, %38 : vector<4x128xf32>
    %40 = vector.extract_strided_slice %0 {offsets = [0, 6], sizes = [4, 1], strides = [1, 1]} : vector<4x16xf32> to vector<4x1xf32>
    %41 = vector.extract_strided_slice %1 {offsets = [6, 0], sizes = [1, 128], strides = [1, 1]} : vector<16x128xf32> to vector<1x128xf32>
    %42 = vector.broadcast %40 : vector<4x1xf32> to vector<4x128xf32>
    %43 = vector.broadcast %41 : vector<1x128xf32> to vector<4x128xf32>
    %44 = arith.mulf %42, %43 : vector<4x128xf32>
    %45 = arith.addf %39, %44 : vector<4x128xf32>
    %46 = vector.extract_strided_slice %0 {offsets = [0, 7], sizes = [4, 1], strides = [1, 1]} : vector<4x16xf32> to vector<4x1xf32>
    %47 = vector.extract_strided_slice %1 {offsets = [7, 0], sizes = [1, 128], strides = [1, 1]} : vector<16x128xf32> to vector<1x128xf32>
    %48 = vector.broadcast %46 : vector<4x1xf32> to vector<4x128xf32>
    %49 = vector.broadcast %47 : vector<1x128xf32> to vector<4x128xf32>
    %50 = arith.mulf %48, %49 : vector<4x128xf32>
    %51 = arith.addf %45, %50 : vector<4x128xf32>
    %52 = vector.extract_strided_slice %0 {offsets = [0, 8], sizes = [4, 1], strides = [1, 1]} : vector<4x16xf32> to vector<4x1xf32>
    %53 = vector.extract_strided_slice %1 {offsets = [8, 0], sizes = [1, 128], strides = [1, 1]} : vector<16x128xf32> to vector<1x128xf32>
    %54 = vector.broadcast %52 : vector<4x1xf32> to vector<4x128xf32>
    %55 = vector.broadcast %53 : vector<1x128xf32> to vector<4x128xf32>
    %56 = arith.mulf %54, %55 : vector<4x128xf32>
    %57 = arith.addf %51, %56 : vector<4x128xf32>
    %58 = vector.extract_strided_slice %0 {offsets = [0, 9], sizes = [4, 1], strides = [1, 1]} : vector<4x16xf32> to vector<4x1xf32>
    %59 = vector.extract_strided_slice %1 {offsets = [9, 0], sizes = [1, 128], strides = [1, 1]} : vector<16x128xf32> to vector<1x128xf32>
    %60 = vector.broadcast %58 : vector<4x1xf32> to vector<4x128xf32>
    %61 = vector.broadcast %59 : vector<1x128xf32> to vector<4x128xf32>
    %62 = arith.mulf %60, %61 : vector<4x128xf32>
    %63 = arith.addf %57, %62 : vector<4x128xf32>
    %64 = vector.extract_strided_slice %0 {offsets = [0, 10], sizes = [4, 1], strides = [1, 1]} : vector<4x16xf32> to vector<4x1xf32>
    %65 = vector.extract_strided_slice %1 {offsets = [10, 0], sizes = [1, 128], strides = [1, 1]} : vector<16x128xf32> to vector<1x128xf32>
    %66 = vector.broadcast %64 : vector<4x1xf32> to vector<4x128xf32>
    %67 = vector.broadcast %65 : vector<1x128xf32> to vector<4x128xf32>
    %68 = arith.mulf %66, %67 : vector<4x128xf32>
    %69 = arith.addf %63, %68 : vector<4x128xf32>
    %70 = vector.extract_strided_slice %0 {offsets = [0, 11], sizes = [4, 1], strides = [1, 1]} : vector<4x16xf32> to vector<4x1xf32>
    %71 = vector.extract_strided_slice %1 {offsets = [11, 0], sizes = [1, 128], strides = [1, 1]} : vector<16x128xf32> to vector<1x128xf32>
    %72 = vector.broadcast %70 : vector<4x1xf32> to vector<4x128xf32>
    %73 = vector.broadcast %71 : vector<1x128xf32> to vector<4x128xf32>
    %74 = arith.mulf %72, %73 : vector<4x128xf32>
    %75 = arith.addf %69, %74 : vector<4x128xf32>
    %76 = vector.extract_strided_slice %0 {offsets = [0, 12], sizes = [4, 1], strides = [1, 1]} : vector<4x16xf32> to vector<4x1xf32>
    %77 = vector.extract_strided_slice %1 {offsets = [12, 0], sizes = [1, 128], strides = [1, 1]} : vector<16x128xf32> to vector<1x128xf32>
    %78 = vector.broadcast %76 : vector<4x1xf32> to vector<4x128xf32>
    %79 = vector.broadcast %77 : vector<1x128xf32> to vector<4x128xf32>
    %80 = arith.mulf %78, %79 : vector<4x128xf32>
    %81 = arith.addf %75, %80 : vector<4x128xf32>
    %82 = vector.extract_strided_slice %0 {offsets = [0, 13], sizes = [4, 1], strides = [1, 1]} : vector<4x16xf32> to vector<4x1xf32>
    %83 = vector.extract_strided_slice %1 {offsets = [13, 0], sizes = [1, 128], strides = [1, 1]} : vector<16x128xf32> to vector<1x128xf32>
    %84 = vector.broadcast %82 : vector<4x1xf32> to vector<4x128xf32>
    %85 = vector.broadcast %83 : vector<1x128xf32> to vector<4x128xf32>
    %86 = arith.mulf %84, %85 : vector<4x128xf32>
    %87 = arith.addf %81, %86 : vector<4x128xf32>
    %88 = vector.extract_strided_slice %0 {offsets = [0, 14], sizes = [4, 1], strides = [1, 1]} : vector<4x16xf32> to vector<4x1xf32>
    %89 = vector.extract_strided_slice %1 {offsets = [14, 0], sizes = [1, 128], strides = [1, 1]} : vector<16x128xf32> to vector<1x128xf32>
    %90 = vector.broadcast %88 : vector<4x1xf32> to vector<4x128xf32>
    %91 = vector.broadcast %89 : vector<1x128xf32> to vector<4x128xf32>
    %92 = arith.mulf %90, %91 : vector<4x128xf32>
    %93 = arith.addf %87, %92 : vector<4x128xf32>
    %94 = vector.extract_strided_slice %0 {offsets = [0, 15], sizes = [4, 1], strides = [1, 1]} : vector<4x16xf32> to vector<4x1xf32>
    %95 = vector.extract_strided_slice %1 {offsets = [15, 0], sizes = [1, 128], strides = [1, 1]} : vector<16x128xf32> to vector<1x128xf32>
    %96 = vector.broadcast %94 : vector<4x1xf32> to vector<4x128xf32>
    %97 = vector.broadcast %95 : vector<1x128xf32> to vector<4x128xf32>
    %98 = arith.mulf %96, %97 : vector<4x128xf32>
    %99 = arith.addf %93, %98 : vector<4x128xf32>
    %cst = arith.constant 0.000000e+00 : f32
    %100 = vector.broadcast %cst : f32 to vector<4x128xf32>
    %101 = arith.maximumf %99, %100 : vector<4x128xf32>
    %c0_5 = arith.constant 0 : index
    %c0_6 = arith.constant 0 : index
    %102 = vector.load %arg4[%c0_5, %c0_6] : memref<4x128xf32, #tpu.memory_space<vmem>>, vector<4x128xf32>
    tpu.vector_store %arg4[%c0_5, %c0_6], %101 {strides = array<i32>} : memref<4x128xf32, #tpu.memory_space<vmem>>, vector<4x128xf32>,
    return
  }
  func.func @transform_0(%arg0: i32) -> (i32, i32) {
    %c0_i32 = arith.constant 0 : i32
    %c0_i32_0 = arith.constant 0 : i32
    return %arg0, %c0_i32 : i32, i32
  }
  func.func @transform_1(%arg0: i32) -> (i32, i32) {
    %c0_i32 = arith.constant 0 : i32
    %c0_i32_0 = arith.constant 0 : i32
    %c0_i32_1 = arith.constant 0 : i32
    return %c0_i32, %c0_i32_0 : i32, i32
  }
  func.func @transform_2(%arg0: i32) -> (i32, i32) {
    %c0_i32 = arith.constant 0 : i32
    %c0_i32_0 = arith.constant 0 : i32
    %c0_i32_1 = arith.constant 0 : i32
    return %c0_i32, %c0_i32_0 : i32, i32
  }
  func.func @transform_3(%arg0: i32) -> (i32, i32) {
    %c0_i32 = arith.constant 0 : i32
    %c0_i32_0 = arith.constant 0 : i32
    return %arg0, %c0_i32 : i32, i32
  }
}

</mosaic_0001>

<llo_original>
// kernel: tpu_custom_call.1
$region0: #{tpu_custom_call.1}
  #allocation0 [shape = 'u32[]', space=smem, size = 0x4, offset = 0x4, fixed_abs, tag = 'smem constant byte address 0x4 - core index']
  #allocation1 [shape = 'u32[72,128]{1,0:T(1,128)}', space=vmem, size = 0x9000, scoped, tag = 'internal scratch']
  %s0 = inlined_call_operand.hbm [shape: f32[4,16], index: 0, kind: input, shape index: {}]
  %s1 = inlined_call_operand.hbm [shape: f32[16,128], index: 1, kind: input, shape index: {}]
  %s2 = inlined_call_operand.vmem [shape: f32[1,128], index: 2, kind: input, shape index: {}]
  %s3 = inlined_call_operand.hbm [shape: f32[4,128], index: 3, kind: output, shape index: {}]
  %s4 = sld [smem:[#allocation0]]
  $region30: #{tpu_custom_call.1} parent=0
    _
  %s6 = ssub.s32 1, %s4
  %s7 = scalar_select 0, %s6, %s4
  $region1: #{tpu_custom_call.1} parent=0
    #allocation2 [shape = 'u8[2048]{0}', space=vmem, size = 0x800, scoped, tag = 'input window, operand 0, single buffered']
    #allocation3 [shape = 's32[1]{0}', space=sflag, size = 0x4, scoped, tag = 'scoped memory for tpu_custom_call.1']
    #allocation4 [shape = 's32[1]{0}', space=sflag, size = 0x4, scoped, tag = 'scoped memory for tpu_custom_call.1']
    #allocation5 [shape = 'u8[8192]{0}', space=vmem, size = 0x2000, scoped, tag = 'input window, operand 1, single buffered']
    #allocation6 [shape = 's32[1]{0}', space=sflag, size = 0x4, scoped, tag = 'scoped memory for tpu_custom_call.1']
    #allocation7 [shape = 'u8[2048]{0}', space=vmem, size = 0x800, scoped, tag = 'output window, operand 0, single buffered']
    %8 = vsyncpa [#allocation3], 0
    %9 = vsyncpa [#allocation6], 0
    %10 = vsyncpa [#allocation4], 0
    // Predicated region
    $region2: #{tpu_custom_call.1} parent=1 // pred_check
      _
    $region3: #{tpu_custom_call.1} parent=1 // pred_check_branch
      %12 = sbr.rel (0) target = $region5
    $region4: #{tpu_custom_call.1} parent=1 // pred_region
      %14 = vsyncadd [#allocation3], 0
      %s16 = sshll.u32 %s0, 4
      %s17 = int_to_ptr.hbm [resolvable:$true] %s16
      %s18 = sshll.u32 [#allocation2], 4
      %s19 = int_to_ptr.vmem [resolvable:$true] %s18
      %21 = dma.hbm_to_vmem [thread:$0]  %s17, 64, %s19, [#allocation3]
    $region5: #{tpu_custom_call.1} parent=1 // pred_fallthru
      _
    // Predicated region
    $region6: #{tpu_custom_call.1} parent=1 // pred_check
      _
    $region7: #{tpu_custom_call.1} parent=1 // pred_check_branch
      %23 = sbr.rel (0) target = $region9
    $region8: #{tpu_custom_call.1} parent=1 // pred_region
      %25 = vsyncadd [#allocation6], 0
      %s26 = sshll.u32 %s1, 4
      %s27 = int_to_ptr.hbm [resolvable:$true] %s26
      %s28 = sshll.u32 [#allocation5], 4
      %s29 = int_to_ptr.vmem [resolvable:$true] %s28
      %34 = dma.hbm_to_vmem [thread:$0]  %s27, 256, %s29, [#allocation6], 128, 128, 8
    $region9: #{tpu_custom_call.1} parent=1 // pred_fallthru
      _
    // Predicated region
    $region10: #{tpu_custom_call.1} parent=1 // pred_check
      _
    $region11: #{tpu_custom_call.1} parent=1 // pred_check_branch
      %36 = sbr.rel (0) target = $region13
    $region12: #{tpu_custom_call.1} parent=1 // pred_region
      _
    $region13: #{tpu_custom_call.1} parent=1 // pred_fallthru
      _
    // Predicated region
    $region14: #{tpu_custom_call.1} parent=1 // pred_check
      _
    $region15: #{tpu_custom_call.1} parent=1 // pred_check_branch
      %38 = sbr.rel (0) target = $region17
    $region16: #{tpu_custom_call.1} parent=1 // pred_region
      %40 = dma.done [#allocation3], 64
    $region17: #{tpu_custom_call.1} parent=1 // pred_fallthru
      _
    // Predicated region
    $region18: #{tpu_custom_call.1} parent=1 // pred_check
      _
    $region19: #{tpu_custom_call.1} parent=1 // pred_check_branch
      %42 = sbr.rel (0) target = $region21
    $region20: #{tpu_custom_call.1} parent=1 // pred_region
      %44 = dma.done [#allocation6], 256
    $region21: #{tpu_custom_call.1} parent=1 // pred_fallthru
      _
    %v45 = vld [vmem:[#allocation2] sm:$0xf]
    %v46 = vld [vmem:[#allocation5] sm:$0xff]
    %v47 = vld [vmem:[#allocation5 + $0x8] sm:$0xff]
    %v48 = vld [vmem:[%s2] sm:$0x1]
    %50 = vset.pattern.permute.xlu0 0
    %51 = vperm.xlu0 %50, %v45
    %v52 = vpop.permute.xlu0 %51
    %v54 = vperm.slane %v46, 0
    %v55 = vmul.f32 %v52, %v54
    %v57 = vperm.slane %v48, 0
    %v59 = vadd.f32 %v57, %v55
    %60 = vset.pattern.permute.xlu0 1
    %61 = vperm.xlu0 %60, %v45
    %v62 = vpop.permute.xlu0 %61
    %v64 = vperm.slane %v46, 1
    %v65 = vmul.f32 %v62, %v64
    %v66 = vadd.f32 %v59, %v65
    %67 = vset.pattern.permute.xlu0 2
    %68 = vperm.xlu0 %67, %v45
    %v69 = vpop.permute.xlu0 %68
    %v71 = vperm.slane %v46, 2
    %v72 = vmul.f32 %v69, %v71
    %v73 = vadd.f32 %v66, %v72
    %74 = vset.pattern.permute.xlu0 3
    %75 = vperm.xlu0 %74, %v45
    %v76 = vpop.permute.xlu0 %75
    %v78 = vperm.slane %v46, 3
    %v79 = vmul.f32 %v76, %v78
    %v80 = vadd.f32 %v73, %v79
    %81 = vset.pattern.permute.xlu0 4
    %82 = vperm.xlu0 %81, %v45
    %v83 = vpop.permute.xlu0 %82
    %v85 = vperm.slane %v46, 4
    %v86 = vmul.f32 %v83, %v85
    %v87 = vadd.f32 %v80, %v86
    %88 = vset.pattern.permute.xlu0 5
    %89 = vperm.xlu0 %88, %v45
    %v90 = vpop.permute.xlu0 %89
    %v92 = vperm.slane %v46, 5
    %v93 = vmul.f32 %v90, %v92
    %v94 = vadd.f32 %v87, %v93
    %95 = vset.pattern.permute.xlu0 6
    %96 = vperm.xlu0 %95, %v45
    %v97 = vpop.permute.xlu0 %96
    %v99 = vperm.slane %v46, 6
    %v100 = vmul.f32 %v97, %v99
    %v101 = vadd.f32 %v94, %v100
    %102 = vset.pattern.permute.xlu0 7
    %103 = vperm.xlu0 %102, %v45
    %v104 = vpop.permute.xlu0 %103
    %v106 = vperm.slane %v46, 7
    %v107 = vmul.f32 %v104, %v106
    %v108 = vadd.f32 %v101, %v107
    %109 = vset.pattern.permute.xlu0 8
    %110 = vperm.xlu0 %109, %v45
    %v111 = vpop.permute.xlu0 %110
    %v113 = vperm.slane %v47, 0
    %v114 = vmul.f32 %v111, %v113
    %v115 = vadd.f32 %v108, %v114
    %116 = vset.pattern.permute.xlu0 9
    %117 = vperm.xlu0 %116, %v45
    %v118 = vpop.permute.xlu0 %117
    %v120 = vperm.slane %v47, 1
    %v121 = vmul.f32 %v118, %v120
    %v122 = vadd.f32 %v115, %v121
    %123 = vset.pattern.permute.xlu0 10
    %124 = vperm.xlu0 %123, %v45
    %v125 = vpop.permute.xlu0 %124
    %v127 = vperm.slane %v47, 2
    %v128 = vmul.f32 %v125, %v127
    %v129 = vadd.f32 %v122, %v128
    %130 = vset.pattern.permute.xlu0 11
    %131 = vperm.xlu0 %130, %v45
    %v132 = vpop.permute.xlu0 %131
    %v134 = vperm.slane %v47, 3
    %v135 = vmul.f32 %v132, %v134
    %v136 = vadd.f32 %v129, %v135
    %137 = vset.pattern.permute.xlu0 12
    %138 = vperm.xlu0 %137, %v45
    %v139 = vpop.permute.xlu0 %138
    %v141 = vperm.slane %v47, 4
    %v142 = vmul.f32 %v139, %v141
    %v143 = vadd.f32 %v136, %v142
    %144 = vset.pattern.permute.xlu0 13
    %145 = vperm.xlu0 %144, %v45
    %v146 = vpop.permute.xlu0 %145
    %v148 = vperm.slane %v47, 5
    %v149 = vmul.f32 %v146, %v148
    %v150 = vadd.f32 %v143, %v149
    %151 = vset.pattern.permute.xlu0 14
    %152 = vperm.xlu0 %151, %v45
    %v153 = vpop.permute.xlu0 %152
    %v155 = vperm.slane %v47, 6
    %v156 = vmul.f32 %v153, %v155
    %v157 = vadd.f32 %v150, %v156
    %158 = vset.pattern.permute.xlu0 15
    %159 = vperm.xlu0 %158, %v45
    %v160 = vpop.permute.xlu0 %159
    %v162 = vperm.slane %v47, 7
    %v163 = vmul.f32 %v160, %v162
    %v164 = vadd.f32 %v157, %v163
    %v165 = vmax.f32 %v164, 0.0
    %166 = vst [vmem:[#allocation7] sm:$0xf] %v165
    // Predicated region
    $region22: #{tpu_custom_call.1} parent=1 // pred_check
      _
    $region23: #{tpu_custom_call.1} parent=1 // pred_check_branch
      %168 = sbr.rel (0) target = $region25
    $region24: #{tpu_custom_call.1} parent=1 // pred_region
      %170 = vsyncadd [#allocation4], 0
      %s172 = sshll.u32 [#allocation7], 4
      %s173 = int_to_ptr.vmem [resolvable:$true] %s172
      %s174 = sshll.u32 %s3, 4
      %s175 = int_to_ptr.hbm [resolvable:$true] %s174
      %177 = dma.vmem_to_hbm [thread:$0]  %s173, 64, %s175, [#allocation4]
    $region25: #{tpu_custom_call.1} parent=1 // pred_fallthru
      _
    // Predicated region
    $region26: #{tpu_custom_call.1} parent=1 // pred_check
      _
    $region27: #{tpu_custom_call.1} parent=1 // pred_check_branch
      %179 = sbr.rel (0) target = $region29
    $region28: #{tpu_custom_call.1} parent=1 // pred_region
      %181 = dma.done [#allocation4], 64
    $region29: #{tpu_custom_call.1} parent=1 // pred_fallthru
      _
    %182 = vsyncpa [#allocation3], 1
    %183 = vsyncpa [#allocation6], 1
    %184 = vsyncpa [#allocation4], 1

</llo_original>
